<compile_context>
chip_gen: v7x
topology: tpu7x:2x2x1
jax: 0.10.0
libtpu: 0.0.40
codegen_flags: <defaults>
</compile_context>

<pallas_src>
import functools
import math

import jax
import jax.numpy as jnp
from jax.experimental import pallas as pl
from jax.experimental.pallas import tpu as pltpu

EPS = 1e-12  # F.normalize eps


# ---------------------------------------------------------------------------
# Generation-aware configuration (VMEM budget, elementwise dtype, core count).
# ---------------------------------------------------------------------------
def _gen_config():
    try:
        kind = jax.devices()[0].device_kind.lower()
    except Exception:
        kind = ""
    if "v7" in kind or "7x" in kind:
        # 64 MiB VMEM per TC, 2 TensorCores, bf16 VPU+EUP.
        return {"elem_dtype": jnp.bfloat16, "budget": 40 << 20,
                "vmem_limit": 56 << 20, "num_cores": 2}
    if "v6" in kind:
        # 128 MiB VMEM, bf16 VPU+EUP.
        return {"elem_dtype": jnp.bfloat16, "budget": 64 << 20,
                "vmem_limit": 100 << 20, "num_cores": 1}
    if "v5" in kind:
        # 128 MiB VMEM, no bf16 VPU/EUP -> keep (T,N) elementwise math in f32.
        return {"elem_dtype": jnp.float32, "budget": 64 << 20,
                "vmem_limit": 100 << 20, "num_cores": 1}
    # Unknown / older generation: conservative defaults.
    return {"elem_dtype": jnp.float32, "budget": 24 << 20,
            "vmem_limit": None, "num_cores": 1}


def _pick_row_tile(n_rows, bytes_per_row, fixed_bytes, budget_bytes,
                   max_tile, multiple=8, min_steps=1):
    """Largest divisor-of-n_rows tile (multiple of `multiple`, <= max_tile,
    giving >= min_steps grid steps) whose VMEM estimate fits the budget."""
    def candidates(mult, steps):
        return [d for d in range(mult, min(n_rows, max_tile) + 1, mult)
                if n_rows % d == 0 and n_rows // d >= steps]

    for mult, steps in ((multiple, min_steps), (multiple, 1), (8, 1)):
        cand = candidates(mult, steps)
        if cand:
            fit = [d for d in cand
                   if fixed_bytes + d * bytes_per_row <= budget_bytes]
            return max(fit) if fit else min(cand)
    # TODO(synk): pad n_rows (e.g. to a multiple of 32) for graph sizes with no
    # suitable divisor; this full-extent fallback can blow VMEM for huge N.
    return n_rows


# ---------------------------------------------------------------------------
# Kernel A: fused per-factor projection
#   out = per-factor-l2norm( leaky_relu( all_emb @ concat_i(W_i + b_i), 0.2 ) )
# ---------------------------------------------------------------------------
def _proj_kernel(emb_ref, w_ref, out_ref, *, fac_k, dim_k):
    # Single wide bf16 matmul for all factors, f32 accumulation on the MXU.
    h = jnp.dot(emb_ref[...].astype(jnp.bfloat16), w_ref[...],
                preferred_element_type=jnp.float32)
    h = jnp.maximum(h, 0.2 * h)                           # LeakyReLU(0.2)
    parts = []
    for i in range(fac_k):                                # per-factor L2 norm
        hi = h[:, i * dim_k:(i + 1) * dim_k]
        nrm = jnp.sqrt(jnp.sum(hi * hi, axis=1, keepdims=True))
        parts.append(hi / jnp.maximum(nrm, EPS))          # F.normalize(dim=-1)
    out_ref[...] = jnp.concatenate(parts, axis=-1).astype(out_ref.dtype)


def project(all_emb, w_cat_bf16, fac_k, dim_k, cfg, max_row_tile=2048):
    N, D = all_emb.shape
    K = fac_k * dim_k
    # Per-row live: double-buffered f32 input tile, double-buffered bf16 out
    # tile, f32 h + normalized parts.  Fixed: double-buffered bf16 weight.
    bytes_per_row = 2 * D * 4 + 2 * K * 2 + 3 * K * 4
    fixed_bytes = 2 * D * K * 2
    tile_r = _pick_row_tile(N, bytes_per_row, fixed_bytes, cfg["budget"],
                            max_row_tile, multiple=16,
                            min_steps=cfg["num_cores"])
    return pl.pallas_call(
        functools.partial(_proj_kernel, fac_k=fac_k, dim_k=dim_k),
        out_shape=jax.ShapeDtypeStruct((N, K), jnp.bfloat16),
        grid=(N // tile_r,),
        in_specs=[
            pl.BlockSpec((tile_r, D), lambda r: (r, 0)),  # streamed row tiles
            pl.BlockSpec((D, K), lambda r: (0, 0)),       # bf16 weights resident
        ],
        out_specs=pl.BlockSpec((tile_r, K), lambda r: (r, 0)),
        compiler_params=pltpu.CompilerParams(
            dimension_semantics=("parallel",),
            vmem_limit_bytes=cfg["vmem_limit"]),
    )(all_emb, w_cat_bf16)


# ---------------------------------------------------------------------------
# Kernel B: all iter_k neighborhood-routing iterations, row-tiled + fused.
# ---------------------------------------------------------------------------
def _route_kernel(mask_ref, fac_all_ref, out_ref,
                  *, fac_k, dim_k, iter_k, tile_r, elem_dtype):
    mask_f = mask_ref[...].astype(jnp.float32)            # (T, N), widened once
    fac_all = fac_all_ref[...]                            # (N, K) bf16 tails
    # Head/residual rows are a slice of the resident fac_emb (no extra stream).
    row0 = pl.multiple_of(pl.program_id(0) * tile_r, tile_r)
    fac_row = fac_all_ref[pl.ds(row0, tile_r), :]         # (T, K) bf16
    tails = [fac_all[:, i * dim_k:(i + 1) * dim_k] for i in range(fac_k)]
    resid = [fac_row[:, i * dim_k:(i + 1) * dim_k].astype(jnp.float32)
             for i in range(fac_k)]
    cur = list(resid)                                     # routing state (f32)

    for _ in range(iter_k):
        # --- streaming factor softmax (unmasked denominator, as in torch) ----
        # Scores are inner products of L2-normalized vectors => |S| <= 1, so
        # no max-subtraction is needed and sum_e >= fac_k * e^-1 > 0 (no EPS).
        exps = []
        sum_e = None
        for i in range(fac_k):
            s = jax.lax.dot_general(
                cur[i].astype(jnp.bfloat16), tails[i], (((1,), (1,)), ((), ())),
                preferred_element_type=jnp.float32)       # (T, N) f32 scores
            e = jnp.exp(s.astype(elem_dtype))             # bf16 EUP on v6e/v7x
            exps.append(e)
            sum_e = e if sum_e is None else sum_e + e
        # Mask folded ONCE into the reciprocal of the softmax denominator.
        inv_m = (pl.reciprocal(sum_e.astype(jnp.float32), approx=True)
                 * mask_f).astype(elem_dtype)             # (T, N)

        # --- per-factor aggregation + residual + L2 norm ---------------------
        new_cur = []
        for i in range(fac_k):
            p = (exps[i] * inv_m).astype(jnp.bfloat16)    # probabilities, bf16
            agg = jnp.dot(p, tails[i],
                          preferred_element_type=jnp.float32)   # (T, dim_k) f32
            e2 = resid[i] + agg                           # fac_emb[i] + agg
            nrm = jnp.sqrt(jnp.sum(e2 * e2, axis=1, keepdims=True))
            new_cur.append(e2 / jnp.maximum(nrm, EPS))    # F.normalize(dim=1)
        cur = new_cur

    # Final output directly in factor-concatenated, lane-dense f32 layout.
    out_ref[...] = jnp.concatenate(cur, axis=-1).astype(out_ref.dtype)


def route(fac_cat_bf16, mask_i8, fac_k, dim_k, iter_k, cfg, max_row_tile=512):
    N, K = fac_cat_bf16.shape
    eb = jnp.dtype(cfg["elem_dtype"]).itemsize
    # Honest per-destination-row live set: double-buffered int8 mask tile,
    # f32 mask, fac_k exp buffers + sum_e + inv_m in elem dtype, a couple of
    # f32 (.., N) temporaries (scores / recip widen), double-buffered f32
    # output tile and small per-factor state.
    bytes_per_row = (2 * N * 1 + N * 4 + (fac_k + 2) * N * eb + 2 * N * 4
                     + 2 * K * 4 + 6 * K * 4)
    fixed_bytes = 2 * N * K * 2        # double-buffered resident bf16 fac_emb
    tile_r = _pick_row_tile(N, bytes_per_row, fixed_bytes, cfg["budget"],
                            max_row_tile, multiple=32,
                            min_steps=cfg["num_cores"])
    return pl.pallas_call(
        functools.partial(_route_kernel, fac_k=fac_k, dim_k=dim_k,
                          iter_k=iter_k, tile_r=tile_r,
                          elem_dtype=cfg["elem_dtype"]),
        out_shape=jax.ShapeDtypeStruct((N, K), jnp.float32),
        grid=(N // tile_r,),
        in_specs=[
            pl.BlockSpec((tile_r, N), lambda r: (r, 0)),  # int8 adjacency rows
            pl.BlockSpec((N, K), lambda r: (0, 0)),       # bf16 fac_emb resident
        ],
        out_specs=pl.BlockSpec((tile_r, K), lambda r: (r, 0)),
        compiler_params=pltpu.CompilerParams(
            dimension_semantics=("parallel",),
            vmem_limit_bytes=cfg["vmem_limit"]),
    )(mask_i8, fac_cat_bf16)


# ---------------------------------------------------------------------------
# Layer / model glue (plain JAX: tiny parameter reshapes, concat, split).
# ---------------------------------------------------------------------------
def layer_forward(mask_i8, all_emb, W, b, iter_k, cfg, max_row_tile=512):
    fac_k, D, dim_k = W.shape
    # torch: matmul(all_emb, W + b) -> fold the broadcast bias into the weight
    # and concatenate the factors along the output feature axis (bf16 weights).
    w_cat = jnp.transpose(W + b, (1, 0, 2)).reshape(
        D, fac_k * dim_k).astype(jnp.bfloat16)
    fac_cat = project(all_emb, w_cat, fac_k, dim_k, cfg)
    return route(fac_cat, mask_i8, fac_k, dim_k, iter_k, cfg, max_row_tile)


def disengcn_forward(embeds, layer_params, adj_mask, iter_k, num_list,
                     max_row_tile=512):
    cfg = _gen_config()
    all_emb = jnp.concatenate(embeds, axis=0)             # (N, dim_latent)
    mask_i8 = adj_mask.astype(jnp.int8)                   # {0,1}: lossless, 4x less HBM
    for W, b in layer_params:
        all_emb = layer_forward(mask_i8, all_emb, W, b, iter_k, cfg,
                                max_row_tile)
        # F.dropout(..., training=False) -> identity (eval mode)
    offsets = []
    acc = 0
    for n in num_list[:-1]:
        acc += n
        offsets.append(acc)
    return jnp.split(all_emb, offsets, axis=0)


# ---------------------------------------------------------------------------
# Pure-JAX f32 reference (dense-mask formulation) for a numerical sanity check.
# ---------------------------------------------------------------------------
def _reference_forward(embeds, layer_params, adj_mask, iter_k, num_list):
    all_emb = jnp.concatenate(embeds, axis=0)
    mask = adj_mask.astype(jnp.float32)
    for W, b in layer_params:
        fac_k, D, dim_k = W.shape
        h = jnp.einsum("nd,fdk->fnk", all_emb, W + b)
        h = jnp.where(h > 0, h, 0.2 * h)
        h = h / jnp.maximum(jnp.linalg.norm(h, axis=2, keepdims=True), EPS)
        fac = h
        cur = fac
        for _ in range(iter_k):
            S = jnp.einsum("fnk,fmk->fnm", cur, fac)
            P = jax.nn.softmax(S, axis=0) * mask[None]
            agg = jnp.einsum("fnm,fmk->fnk", P, fac)
            e = fac + agg
            cur = e / jnp.maximum(jnp.linalg.norm(e, axis=2, keepdims=True), EPS)
        all_emb = jnp.transpose(cur, (1, 0, 2)).reshape(
            all_emb.shape[0], fac_k * dim_k)
    offsets = []
    acc = 0
    for n in num_list[:-1]:
        acc += n
        offsets.append(acc)
    return jnp.split(all_emb, offsets, axis=0)


# ---------------------------------------------------------------------------
# Deterministic parameter construction (xavier_uniform_, like the module).
# ---------------------------------------------------------------------------
def xavier_uniform(key, shape):
    if len(shape) == 2:
        fan_in, fan_out = shape[1], shape[0]
    else:
        receptive = math.prod(shape[2:])
        fan_in = shape[1] * receptive
        fan_out = shape[0] * receptive
    bound = math.sqrt(6.0 / (fan_in + fan_out))
    return jax.random.uniform(key, shape, jnp.float32, -bound, bound)


if __name__ == "__main__":
    # Small synthetic config (mirrors CFG of the module).
    num_user, num_item, num_tag = 24, 24, 16
    num_list = [num_user, num_item, num_tag]
    N = sum(num_list)                 # 64
    dim_latent = 32
    factor_k = 4
    iterate_k = 2
    num_layer = 2
    dim_k = dim_latent // factor_k    # 8

    key = jax.random.PRNGKey(0)
    keys = jax.random.split(key, 3 + 2 * num_layer + 1)

    # nn.ParameterList embed
    embeds = [xavier_uniform(keys[i], (num_list[i], dim_latent)) for i in range(3)]

    # per-layer W (fac_k, in_dim, dim_k) and b (fac_k, 1, dim_k)
    layer_params = []
    for l in range(num_layer):
        W = xavier_uniform(keys[3 + 2 * l], (factor_k, dim_latent, dim_k))
        b = xavier_uniform(keys[3 + 2 * l + 1], (factor_k, 1, dim_k))
        layer_params.append((W, b))

    # synthetic graph: dense {0,1} adjacency mask standing in for norm_adj's
    # COO indices (its values are never used by the forward pass).
    adj_mask = jax.random.bernoulli(keys[-1], 0.15, (N, N)).astype(jnp.float32)

    # max_row_tile=32 -> routing grid of 2 row tiles, exercising the tiled path.
    list_emb = disengcn_forward(embeds, layer_params, adj_mask, iterate_k,
                                num_list, max_row_tile=32)
    list_emb = jax.block_until_ready(list_emb)

    assert list_emb[0].shape == (num_user, dim_latent)
    assert list_emb[1].shape == (num_item, dim_latent)
    assert list_emb[2].shape == (num_tag, dim_latent)
    assert all(bool(jnp.all(jnp.isfinite(e))) for e in list_emb)

    # Numerical check against the pure-JAX f32 dense reference.  Tolerance
    # budgets for the bf16 MXU operands / bf16 elementwise pipeline and the
    # approximate reciprocal, compounded over iter_k iterations x num_layer.
    ref_emb = _reference_forward(embeds, layer_params, adj_mask, iterate_k,
                                 num_list)
    for got, ref in zip(list_emb, ref_emb):
        err = float(jnp.max(jnp.abs(got - ref)))
        assert err < 3e-2, f"max abs diff vs reference too large: {err}"

    print("KERNEL_OK")
</pallas_src>

<mosaic_0001>
module attributes {stable_mosaic.version = 11 : i64} {
  func.func @_proj_kernel(%arg0: i32, %arg1: memref<64x32xf32, #tpu.memory_space<vmem>>, %arg2: memref<32x32xbf16, #tpu.memory_space<vmem>>, %arg3: memref<64x32xbf16, #tpu.memory_space<vmem>>) attributes {dimension_semantics = [#tpu.dimension_semantics<parallel>], iteration_bounds = array<i64: 1>, scalar_prefetch = 0 : i64, scratch_operands = 0 : i64, tpu.core_type = #tpu.core_type<tc>, window_params = [{transform_indices = @transform_0, window_bounds = array<i64: 64, 32>}, {pipeline_mode = #tpu.pipeline_mode<synchronous>, transform_indices = @transform_1, window_bounds = array<i64: 32, 32>}, {transform_indices = @transform_2, window_bounds = array<i64: 64, 32>}]} {
    %c0 = arith.constant 0 : index
    %c0_0 = arith.constant 0 : index
    %0 = vector.load %arg1[%c0, %c0_0] : memref<64x32xf32, #tpu.memory_space<vmem>>, vector<64x32xf32>
    %1 = arith.truncf %0 : vector<64x32xf32> to vector<64x32xbf16>
    %c0_1 = arith.constant 0 : index
    %c0_2 = arith.constant 0 : index
    %2 = vector.load %arg2[%c0_1, %c0_2] : memref<32x32xbf16, #tpu.memory_space<vmem>>, vector<32x32xbf16>
    %cst = arith.constant dense<0.000000e+00> : vector<64x32xf32>
    %3 = tpu.matmul %1, %2, %cst {dimension_numbers = #tpu.dot_dimension_numbers<[1], [0], [0], [1], [0, 0, 1, 1], [], []>} : vector<64x32xbf16>, vector<32x32xbf16>, vector<64x32xf32> -> vector<64x32xf32>
    %cst_3 = arith.constant 2.000000e-01 : f32
    %4 = vector.broadcast %cst_3 : f32 to vector<64x32xf32>
    %5 = arith.mulf %4, %3 : vector<64x32xf32>
    %6 = arith.maximumf %3, %5 : vector<64x32xf32>
    %7 = vector.extract_strided_slice %6 {offsets = [0, 0], sizes = [64, 8], strides = [1, 1]} : vector<64x32xf32> to vector<64x8xf32>
    %8 = arith.mulf %7, %7 : vector<64x8xf32>
    %cst_4 = arith.constant dense<0.000000e+00> : vector<64xf32>
    %9 = vector.multi_reduction <add>, %8, %cst_4 [1] : vector<64x8xf32> to vector<64xf32>
    %10 = vector.shape_cast %9 : vector<64xf32> to vector<64x1xf32>
    %11 = math.sqrt %10 : vector<64x1xf32>
    %cst_5 = arith.constant 9.99999996E-13 : f32
    %12 = vector.broadcast %cst_5 : f32 to vector<64x1xf32>
    %13 = arith.maximumf %11, %12 : vector<64x1xf32>
    %14 = vector.broadcast %13 : vector<64x1xf32> to vector<64x8xf32>
    %15 = arith.divf %7, %14 : vector<64x8xf32>
    %16 = vector.extract_strided_slice %6 {offsets = [0, 8], sizes = [64, 8], strides = [1, 1]} : vector<64x32xf32> to vector<64x8xf32>
    %17 = arith.mulf %16, %16 : vector<64x8xf32>
    %cst_6 = arith.constant dense<0.000000e+00> : vector<64xf32>
    %18 = vector.multi_reduction <add>, %17, %cst_6 [1] : vector<64x8xf32> to vector<64xf32>
    %19 = vector.shape_cast %18 : vector<64xf32> to vector<64x1xf32>
    %20 = math.sqrt %19 : vector<64x1xf32>
    %cst_7 = arith.constant 9.99999996E-13 : f32
    %21 = vector.broadcast %cst_7 : f32 to vector<64x1xf32>
    %22 = arith.maximumf %20, %21 : vector<64x1xf32>
    %23 = vector.broadcast %22 : vector<64x1xf32> to vector<64x8xf32>
    %24 = arith.divf %16, %23 : vector<64x8xf32>
    %25 = vector.extract_strided_slice %6 {offsets = [0, 16], sizes = [64, 8], strides = [1, 1]} : vector<64x32xf32> to vector<64x8xf32>
    %26 = arith.mulf %25, %25 : vector<64x8xf32>
    %cst_8 = arith.constant dense<0.000000e+00> : vector<64xf32>
    %27 = vector.multi_reduction <add>, %26, %cst_8 [1] : vector<64x8xf32> to vector<64xf32>
    %28 = vector.shape_cast %27 : vector<64xf32> to vector<64x1xf32>
    %29 = math.sqrt %28 : vector<64x1xf32>
    %cst_9 = arith.constant 9.99999996E-13 : f32
    %30 = vector.broadcast %cst_9 : f32 to vector<64x1xf32>
    %31 = arith.maximumf %29, %30 : vector<64x1xf32>
    %32 = vector.broadcast %31 : vector<64x1xf32> to vector<64x8xf32>
    %33 = arith.divf %25, %32 : vector<64x8xf32>
    %34 = vector.extract_strided_slice %6 {offsets = [0, 24], sizes = [64, 8], strides = [1, 1]} : vector<64x32xf32> to vector<64x8xf32>
    %35 = arith.mulf %34, %34 : vector<64x8xf32>
    %cst_10 = arith.constant dense<0.000000e+00> : vector<64xf32>
    %36 = vector.multi_reduction <add>, %35, %cst_10 [1] : vector<64x8xf32> to vector<64xf32>
    %37 = vector.shape_cast %36 : vector<64xf32> to vector<64x1xf32>
    %38 = math.sqrt %37 : vector<64x1xf32>
    %cst_11 = arith.constant 9.99999996E-13 : f32
    %39 = vector.broadcast %cst_11 : f32 to vector<64x1xf32>
    %40 = arith.maximumf %38, %39 : vector<64x1xf32>
    %41 = vector.broadcast %40 : vector<64x1xf32> to vector<64x8xf32>
    %42 = arith.divf %34, %41 : vector<64x8xf32>
    %43 = tpu.concatenate %15, %24, %33, %42 in 1 : vector<64x8xf32>, vector<64x8xf32>, vector<64x8xf32>, vector<64x8xf32> -> vector<64x32xf32>
    %44 = arith.truncf %43 : vector<64x32xf32> to vector<64x32xbf16>
    %c0_12 = arith.constant 0 : index
    %c0_13 = arith.constant 0 : index
    %45 = vector.load %arg3[%c0_12, %c0_13] : memref<64x32xbf16, #tpu.memory_space<vmem>>, vector<64x32xbf16>
    tpu.vector_store %arg3[%c0_12, %c0_13], %44 {strides = array<i32>} : memref<64x32xbf16, #tpu.memory_space<vmem>>, vector<64x32xbf16>,
    return
  }
  func.func @transform_0(%arg0: i32) -> (i32, i32) {
    %c0_i32 = arith.constant 0 : i32
    %c0_i32_0 = arith.constant 0 : i32
    return %arg0, %c0_i32 : i32, i32
  }
  func.func @transform_1(%arg0: i32) -> (i32, i32) {
    %c0_i32 = arith.constant 0 : i32
    %c0_i32_0 = arith.constant 0 : i32
    %c0_i32_1 = arith.constant 0 : i32
    return %c0_i32, %c0_i32_0 : i32, i32
  }
  func.func @transform_2(%arg0: i32) -> (i32, i32) {
    %c0_i32 = arith.constant 0 : i32
    %c0_i32_0 = arith.constant 0 : i32
    return %arg0, %c0_i32 : i32, i32
  }
}

</mosaic_0001>

<llo_original>
// kernel: tpu_custom_call.1
$region0: #{tpu_custom_call.1}
  #allocation0 [shape = 'u32[]', space=smem, size = 0x4, offset = 0x4, fixed_abs, tag = 'smem constant byte address 0x4 - core index']
  #allocation1 [shape = 'u32[144,128]{1,0:T(1,128)}', space=vmem, size = 0x12000, scoped, tag = 'internal scratch']
  %s0 = inlined_call_operand.vmem [shape: f32[64,32], index: 0, kind: input, shape index: {}]
  %s1 = inlined_call_operand.vmem [shape: bf16[32,32], index: 1, kind: input, shape index: {}]
  %s2 = inlined_call_operand.vmem [shape: bf16[64,32], index: 2, kind: output, shape index: {}]
  %s3 = sld [smem:[#allocation0]]
  $region18: #{tpu_custom_call.1} parent=0
    _
  %s5 = ssub.s32 1, %s3
  %s6 = scalar_select 0, %s5, %s3
  // Predicated region
  $region2: #{tpu_custom_call.1} parent=0 // pred_check
    _
  $region3: #{tpu_custom_call.1} parent=0 // pred_check_branch
    %8 = sbr.rel (0) target = $region5
  $region4: #{tpu_custom_call.1} parent=0 // pred_region
    _
  $region5: #{tpu_custom_call.1} parent=0 // pred_fallthru
    _
  // Predicated region
  $region6: #{tpu_custom_call.1} parent=0 // pred_check
    _
  $region7: #{tpu_custom_call.1} parent=0 // pred_check_branch
    %10 = sbr.rel (0) target = $region9
  $region8: #{tpu_custom_call.1} parent=0 // pred_region
    _
  $region9: #{tpu_custom_call.1} parent=0 // pred_fallthru
    _
  %v12 = vld [vmem:[%s0] sm:$0xff]
  %v13 = vld [vmem:[%s0 + $0x8] sm:$0xff]
  %v14 = vld [vmem:[%s0 + $0x10] sm:$0xff]
  %v15 = vld [vmem:[%s0 + $0x18] sm:$0xff]
  %v16 = vld [vmem:[%s0 + $0x20] sm:$0xff]
  %v17 = vld [vmem:[%s0 + $0x28] sm:$0xff]
  %v18 = vld [vmem:[%s0 + $0x30] sm:$0xff]
  %v19 = vld [vmem:[%s0 + $0x38] sm:$0xff]
  %v20 = vpack.c.bf16 %v13, %v12
  %v21 = vpack.c.bf16 %v15, %v14
  %v22 = vpack.c.bf16 %v17, %v16
  %v23 = vpack.c.bf16 %v19, %v18
  %v24 = vld [vmem:[%s1] sm:$0xf]
  %v25 = vld [vmem:[%s1 + $0x4] sm:$0xf]
  %v26 = vld [vmem:[%s1 + $0x8] sm:$0xf]
  %v27 = vld [vmem:[%s1 + $0xc] sm:$0xf]
  %v32 = vunpack.c.l.b16 %v24
  %v33 = vunpack.c.l.b16 %v25
  %v34 = vunpack.c.l.b16 %v26
  %v35 = vunpack.c.l.b16 %v27
  %v36 = vpack.c.b16 %v33, %v32
  %v37 = vpack.c.b16 %v35, %v34
  %vm40 = vcmask 261120
  %v42 = vsel %vm40, %v20, 0
  %v45 = vsel %vm40, %v21, 0
  %v48 = vsel %vm40, %v22, 0
  %v51 = vsel %vm40, %v23, 0
  %53 = vmatprep.subr.bf16.mxu0 0
  %54 = vmatpush1.bf16.msra.mxu0 %v36
  %55 = vmatprep.subr.bf16.mxu0 0
  %56 = vmatpush1.bf16.msra.mxu0 %v37
  %57 = vmatprep.subr.bf16.mxu0 0
  %58 = vmatpush1.bf16.msra.mxu0 0
  %59 = vmatprep.subr.bf16.mxu0 0
  %60 = vmatpush1.bf16.msra.mxu0 0
  %61 = vmatprep.subr.bf16.mxu0 0
  %62 = vmatpush1.bf16.msra.mxu0 0
  %63 = vmatprep.subr.bf16.mxu0 0
  %64 = vmatpush1.bf16.msra.mxu0 0
  %65 = vmatprep.subr.bf16.mxu0 0
  %66 = vmatpush1.bf16.msra.mxu0 0
  %67 = vmatprep.subr.bf16.mxu0 0
  %68 = vmatpush1.bf16.msra.mxu0 0
  %69 = vmatprep.subr.bf16.mxu0 0
  %70 = vmatpush1.bf16.msra.mxu0 0
  %71 = vmatprep.subr.bf16.mxu0 0
  %72 = vmatpush1.bf16.msra.mxu0 0
  %73 = vmatprep.subr.bf16.mxu0 0
  %74 = vmatpush1.bf16.msra.mxu0 0
  %75 = vmatprep.subr.bf16.mxu0 0
  %76 = vmatpush1.bf16.msra.mxu0 0
  %77 = vmatprep.subr.bf16.mxu0 0
  %78 = vmatpush1.bf16.msra.mxu0 0
  %79 = vmatprep.subr.bf16.mxu0 0
  %80 = vmatpush1.bf16.msra.mxu0 0
  %81 = vmatprep.subr.bf16.mxu0 0
  %82 = vmatpush1.bf16.msra.mxu0 0
  %83 = vmatprep.subr.bf16.mxu0 0
  %84 = vmatpush1.bf16.msra.mxu0 0
  %85 = vmatprep.mubr.bf16.mxu0 0
  %86 = vmatmul.mubr.bf16.gmra.mrb[0].mxu0 %v42
  %v87 = vpop.f32.mrb[0].mxu0
  %v88 = vadd.f32 0.0, %v87
  %v89 = vpop.f32.mrb[0].mxu0
  %v90 = vpop.f32.mrb[0].mxu0
  %v91 = vadd.f32 0.0, %v90
  %v92 = vpop.f32.mrb[0].mxu0
  %93 = vmatprep.mubr.bf16.mxu0 0
  %94 = vmatmul.mubr.bf16.gmra.mrb[0].mxu0 %v45
  %v95 = vpop.f32.mrb[0].mxu0
  %v96 = vadd.f32 0.0, %v95
  %v97 = vpop.f32.mrb[0].mxu0
  %v98 = vpop.f32.mrb[0].mxu0
  %v99 = vadd.f32 0.0, %v98
  %v100 = vpop.f32.mrb[0].mxu0
  %101 = vmatprep.mubr.bf16.mxu0 0
  %102 = vmatmul.mubr.bf16.gmra.mrb[0].mxu0 %v48
  %v103 = vpop.f32.mrb[0].mxu0
  %v104 = vadd.f32 0.0, %v103
  %v105 = vpop.f32.mrb[0].mxu0
  %v106 = vpop.f32.mrb[0].mxu0
  %v107 = vadd.f32 0.0, %v106
  %v108 = vpop.f32.mrb[0].mxu0
  %109 = vmatprep.mubr.bf16.mxu0 0
  %110 = vmatmul.mubr.bf16.gmra.mrb[0].mxu0 %v51
  %v111 = vpop.f32.mrb[0].mxu0
  %v112 = vadd.f32 0.0, %v111
  %v113 = vpop.f32.mrb[0].mxu0
  %v114 = vpop.f32.mrb[0].mxu0
  %v115 = vadd.f32 0.0, %v114
  %v116 = vpop.f32.mrb[0].mxu0
  %117 = vdwg.mxu0
  %v118 = vmul.f32 %v88, 0.2
  %v119 = vmul.f32 %v91, 0.2
  %v120 = vmul.f32 %v96, 0.2
  %v121 = vmul.f32 %v99, 0.2
  %v122 = vmul.f32 %v104, 0.2
  %v123 = vmul.f32 %v107, 0.2
  %v124 = vmul.f32 %v112, 0.2
  %v125 = vmul.f32 %v115, 0.2
  %v126 = vmax.f32 %v88, %v118
  %v127 = vmax.f32 %v91, %v119
  %v128 = vmax.f32 %v96, %v120
  %v129 = vmax.f32 %v99, %v121
  %v130 = vmax.f32 %v104, %v122
  %v131 = vmax.f32 %v107, %v123
  %v132 = vmax.f32 %v112, %v124
  %v133 = vmax.f32 %v115, %v125
  %v134 = vmul.f32 %v126, %v126
  %v135 = vmul.f32 %v127, %v127
  %v136 = vmul.f32 %v128, %v128
  %v137 = vmul.f32 %v129, %v129
  %v138 = vmul.f32 %v130, %v130
  %v139 = vmul.f32 %v131, %v131
  %v140 = vmul.f32 %v132, %v132
  %v141 = vmul.f32 %v133, %v133
  %vm142 = vcmask 64512
  %v143 = vsel %vm142, %v134, 0.0
  %144 = vadd.xlane.f32.xlu0 %v143
  %v145 = vpop.xlane.xlu0 %144
  %v146 = vsel %vm142, %v135, 0.0
  %147 = vadd.xlane.f32.xlu0 %v146
  %v148 = vpop.xlane.xlu0 %147
  %v149 = vsel %vm142, %v136, 0.0
  %150 = vadd.xlane.f32.xlu0 %v149
  %v151 = vpop.xlane.xlu0 %150
  %v152 = vsel %vm142, %v137, 0.0
  %153 = vadd.xlane.f32.xlu0 %v152
  %v154 = vpop.xlane.xlu0 %153
  %v155 = vsel %vm142, %v138, 0.0
  %156 = vadd.xlane.f32.xlu0 %v155
  %v157 = vpop.xlane.xlu0 %156
  %v158 = vsel %vm142, %v139, 0.0
  %159 = vadd.xlane.f32.xlu0 %v158
  %v160 = vpop.xlane.xlu0 %159
  %v161 = vsel %vm142, %v140, 0.0
  %162 = vadd.xlane.f32.xlu0 %v161
  %v163 = vpop.xlane.xlu0 %162
  %v164 = vsel %vm142, %v141, 0.0
  %165 = vadd.xlane.f32.xlu0 %v164
  %v166 = vpop.xlane.xlu0 %165
  %v167 = vrsqrt.pop %v145
  %v168 = vmul.f32 %v145, %v167
  %vm169 = vcmp.eq.f32.partialorder %v145, inf
  %v170 = vsel %vm169, %v145, %v168
  %vm171 = vcmp.eq.f32.partialorder %v145, 0.0
  %v172 = vand.u32 %v145, 2147483648
  %v173 = vsel %vm171, %v172, %v170
  %v174 = vrsqrt.pop %v148
  %v175 = vmul.f32 %v148, %v174
  %vm176 = vcmp.eq.f32.partialorder %v148, inf
  %v177 = vsel %vm176, %v148, %v175
  %vm178 = vcmp.eq.f32.partialorder %v148, 0.0
  %v179 = vand.u32 %v148, 2147483648
  %v180 = vsel %vm178, %v179, %v177
  %v181 = vrsqrt.pop %v151
  %v182 = vmul.f32 %v151, %v181
  %vm183 = vcmp.eq.f32.partialorder %v151, inf
  %v184 = vsel %vm183, %v151, %v182
  %vm185 = vcmp.eq.f32.partialorder %v151, 0.0
  %v186 = vand.u32 %v151, 2147483648
  %v187 = vsel %vm185, %v186, %v184
  %v188 = vrsqrt.pop %v154
  %v189 = vmul.f32 %v154, %v188
  %vm190 = vcmp.eq.f32.partialorder %v154, inf
  %v191 = vsel %vm190, %v154, %v189
  %vm192 = vcmp.eq.f32.partialorder %v154, 0.0
  %v193 = vand.u32 %v154, 2147483648
  %v194 = vsel %vm192, %v193, %v191
  %v195 = vrsqrt.pop %v157
  %v196 = vmul.f32 %v157, %v195
  %vm197 = vcmp.eq.f32.partialorder %v157, inf
  %v198 = vsel %vm197, %v157, %v196
  %vm199 = vcmp.eq.f32.partialorder %v157, 0.0
  %v200 = vand.u32 %v157, 2147483648
  %v201 = vsel %vm199, %v200, %v198
  %v202 = vrsqrt.pop %v160
  %v203 = vmul.f32 %v160, %v202
  %vm204 = vcmp.eq.f32.partialorder %v160, inf
  %v205 = vsel %vm204, %v160, %v203
  %vm206 = vcmp.eq.f32.partialorder %v160, 0.0
  %v207 = vand.u32 %v160, 2147483648
  %v208 = vsel %vm206, %v207, %v205
  %v209 = vrsqrt.pop %v163
  %v210 = vmul.f32 %v163, %v209
  %vm211 = vcmp.eq.f32.partialorder %v163, inf
  %v212 = vsel %vm211, %v163, %v210
  %vm213 = vcmp.eq.f32.partialorder %v163, 0.0
  %v214 = vand.u32 %v163, 2147483648
  %v215 = vsel %vm213, %v214, %v212
  %v216 = vrsqrt.pop %v166
  %v217 = vmul.f32 %v166, %v216
  %vm218 = vcmp.eq.f32.partialorder %v166, inf
  %v219 = vsel %vm218, %v166, %v217
  %vm220 = vcmp.eq.f32.partialorder %v166, 0.0
  %v221 = vand.u32 %v166, 2147483648
  %v222 = vsel %vm220, %v221, %v219
  %v223 = vmax.f32 %v173, 1e-12
  %v224 = vmax.f32 %v180, 1e-12
  %v225 = vmax.f32 %v187, 1e-12
  %v226 = vmax.f32 %v194, 1e-12
  %v227 = vmax.f32 %v201, 1e-12
  %v228 = vmax.f32 %v208, 1e-12
  %v229 = vmax.f32 %v215, 1e-12
  %v230 = vmax.f32 %v222, 1e-12
  %v231 = vrcp.pop %v223
  %v232 = vmul.f32 %v126, %v231
  %v233 = vrcp.pop %v224
  %v234 = vmul.f32 %v127, %v233
  %v235 = vrcp.pop %v225
  %v236 = vmul.f32 %v128, %v235
  %v237 = vrcp.pop %v226
  %v238 = vmul.f32 %v129, %v237
  %v239 = vrcp.pop %v227
  %v240 = vmul.f32 %v130, %v239
  %v241 = vrcp.pop %v228
  %v242 = vmul.f32 %v131, %v241
  %v243 = vrcp.pop %v229
  %v244 = vmul.f32 %v132, %v243
  %v245 = vrcp.pop %v230
  %v246 = vmul.f32 %v133, %v245
  %255 = vrot.lane.b32.xlu0 %v134, 120
  %v256 = vpop.permute.xlu0 %255
  %257 = vrot.lane.b32.xlu0 %v135, 120
  %v258 = vpop.permute.xlu0 %257
  %259 = vrot.lane.b32.xlu0 %v136, 120
  %v260 = vpop.permute.xlu0 %259
  %261 = vrot.lane.b32.xlu0 %v137, 120
  %v262 = vpop.permute.xlu0 %261
  %263 = vrot.lane.b32.xlu0 %v138, 120
  %v264 = vpop.permute.xlu0 %263
  %265 = vrot.lane.b32.xlu0 %v139, 120
  %v266 = vpop.permute.xlu0 %265
  %267 = vrot.lane.b32.xlu0 %v140, 120
  %v268 = vpop.permute.xlu0 %267
  %269 = vrot.lane.b32.xlu0 %v141, 120
  %v270 = vpop.permute.xlu0 %269
  %v279 = vsel %vm142, %v256, 0.0
  %280 = vadd.xlane.f32.xlu0 %v279
  %v281 = vpop.xlane.xlu0 %280
  %v282 = vsel %vm142, %v258, 0.0
  %283 = vadd.xlane.f32.xlu0 %v282
  %v284 = vpop.xlane.xlu0 %283
  %v285 = vsel %vm142, %v260, 0.0
  %286 = vadd.xlane.f32.xlu0 %v285
  %v287 = vpop.xlane.xlu0 %286
  %v288 = vsel %vm142, %v262, 0.0
  %289 = vadd.xlane.f32.xlu0 %v288
  %v290 = vpop.xlane.xlu0 %289
  %v291 = vsel %vm142, %v264, 0.0
  %292 = vadd.xlane.f32.xlu0 %v291
  %v293 = vpop.xlane.xlu0 %292
  %v294 = vsel %vm142, %v266, 0.0
  %295 = vadd.xlane.f32.xlu0 %v294
  %v296 = vpop.xlane.xlu0 %295
  %v297 = vsel %vm142, %v268, 0.0
  %298 = vadd.xlane.f32.xlu0 %v297
  %v299 = vpop.xlane.xlu0 %298
  %v300 = vsel %vm142, %v270, 0.0
  %301 = vadd.xlane.f32.xlu0 %v300
  %v302 = vpop.xlane.xlu0 %301
  %v303 = vrsqrt.pop %v281
  %v304 = vmul.f32 %v281, %v303
  %vm305 = vcmp.eq.f32.partialorder %v281, inf
  %v306 = vsel %vm305, %v281, %v304
  %vm307 = vcmp.eq.f32.partialorder %v281, 0.0
  %v308 = vand.u32 %v281, 2147483648
  %v309 = vsel %vm307, %v308, %v306
  %v310 = vrsqrt.pop %v284
  %v311 = vmul.f32 %v284, %v310
  %vm312 = vcmp.eq.f32.partialorder %v284, inf
  %v313 = vsel %vm312, %v284, %v311
  %vm314 = vcmp.eq.f32.partialorder %v284, 0.0
  %v315 = vand.u32 %v284, 2147483648
  %v316 = vsel %vm314, %v315, %v313
  %v317 = vrsqrt.pop %v287
  %v318 = vmul.f32 %v287, %v317
  %vm319 = vcmp.eq.f32.partialorder %v287, inf
  %v320 = vsel %vm319, %v287, %v318
  %vm321 = vcmp.eq.f32.partialorder %v287, 0.0
  %v322 = vand.u32 %v287, 2147483648
  %v323 = vsel %vm321, %v322, %v320
  %v324 = vrsqrt.pop %v290
  %v325 = vmul.f32 %v290, %v324
  %vm326 = vcmp.eq.f32.partialorder %v290, inf
  %v327 = vsel %vm326, %v290, %v325
  %vm328 = vcmp.eq.f32.partialorder %v290, 0.0
  %v329 = vand.u32 %v290, 2147483648
  %v330 = vsel %vm328, %v329, %v327
  %v331 = vrsqrt.pop %v293
  %v332 = vmul.f32 %v293, %v331
  %vm333 = vcmp.eq.f32.partialorder %v293, inf
  %v334 = vsel %vm333, %v293, %v332
  %vm335 = vcmp.eq.f32.partialorder %v293, 0.0
  %v336 = vand.u32 %v293, 2147483648
  %v337 = vsel %vm335, %v336, %v334
  %v338 = vrsqrt.pop %v296
  %v339 = vmul.f32 %v296, %v338
  %vm340 = vcmp.eq.f32.partialorder %v296, inf
  %v341 = vsel %vm340, %v296, %v339
  %vm342 = vcmp.eq.f32.partialorder %v296, 0.0
  %v343 = vand.u32 %v296, 2147483648
  %v344 = vsel %vm342, %v343, %v341
  %v345 = vrsqrt.pop %v299
  %v346 = vmul.f32 %v299, %v345
  %vm347 = vcmp.eq.f32.partialorder %v299, inf
  %v348 = vsel %vm347, %v299, %v346
  %vm349 = vcmp.eq.f32.partialorder %v299, 0.0
  %v350 = vand.u32 %v299, 2147483648
  %v351 = vsel %vm349, %v350, %v348
  %v352 = vrsqrt.pop %v302
  %v353 = vmul.f32 %v302, %v352
  %vm354 = vcmp.eq.f32.partialorder %v302, inf
  %v355 = vsel %vm354, %v302, %v353
  %vm356 = vcmp.eq.f32.partialorder %v302, 0.0
  %v357 = vand.u32 %v302, 2147483648
  %v358 = vsel %vm356, %v357, %v355
  %v359 = vmax.f32 %v309, 1e-12
  %v360 = vmax.f32 %v316, 1e-12
  %v361 = vmax.f32 %v323, 1e-12
  %v362 = vmax.f32 %v330, 1e-12
  %v363 = vmax.f32 %v337, 1e-12
  %v364 = vmax.f32 %v344, 1e-12
  %v365 = vmax.f32 %v351, 1e-12
  %v366 = vmax.f32 %v358, 1e-12
  %v367 = vrcp.pop %v359
  %v368 = vmul.f32 %v126, %v367
  %v369 = vrcp.pop %v360
  %v370 = vmul.f32 %v127, %v369
  %v371 = vrcp.pop %v361
  %v372 = vmul.f32 %v128, %v371
  %v373 = vrcp.pop %v362
  %v374 = vmul.f32 %v129, %v373
  %v375 = vrcp.pop %v363
  %v376 = vmul.f32 %v130, %v375
  %v377 = vrcp.pop %v364
  %v378 = vmul.f32 %v131, %v377
  %v379 = vrcp.pop %v365
  %v380 = vmul.f32 %v132, %v379
  %v381 = vrcp.pop %v366
  %v382 = vmul.f32 %v133, %v381
  %383 = vrot.lane.b32.xlu0 %v134, 112
  %v384 = vpop.permute.xlu0 %383
  %385 = vrot.lane.b32.xlu0 %v135, 112
  %v386 = vpop.permute.xlu0 %385
  %387 = vrot.lane.b32.xlu0 %v136, 112
  %v388 = vpop.permute.xlu0 %387
  %389 = vrot.lane.b32.xlu0 %v137, 112
  %v390 = vpop.permute.xlu0 %389
  %391 = vrot.lane.b32.xlu0 %v138, 112
  %v392 = vpop.permute.xlu0 %391
  %393 = vrot.lane.b32.xlu0 %v139, 112
  %v394 = vpop.permute.xlu0 %393
  %395 = vrot.lane.b32.xlu0 %v140, 112
  %v396 = vpop.permute.xlu0 %395
  %397 = vrot.lane.b32.xlu0 %v141, 112
  %v398 = vpop.permute.xlu0 %397
  %v407 = vsel %vm142, %v384, 0.0
  %408 = vadd.xlane.f32.xlu0 %v407
  %v409 = vpop.xlane.xlu0 %408
  %v410 = vsel %vm142, %v386, 0.0
  %411 = vadd.xlane.f32.xlu0 %v410
  %v412 = vpop.xlane.xlu0 %411
  %v413 = vsel %vm142, %v388, 0.0
  %414 = vadd.xlane.f32.xlu0 %v413
  %v415 = vpop.xlane.xlu0 %414
  %v416 = vsel %vm142, %v390, 0.0
  %417 = vadd.xlane.f32.xlu0 %v416
  %v418 = vpop.xlane.xlu0 %417
  %v419 = vsel %vm142, %v392, 0.0
  %420 = vadd.xlane.f32.xlu0 %v419
  %v421 = vpop.xlane.xlu0 %420
  %v422 = vsel %vm142, %v394, 0.0
  %423 = vadd.xlane.f32.xlu0 %v422
  %v424 = vpop.xlane.xlu0 %423
  %v425 = vsel %vm142, %v396, 0.0
  %426 = vadd.xlane.f32.xlu0 %v425
  %v427 = vpop.xlane.xlu0 %426
  %v428 = vsel %vm142, %v398, 0.0
  %429 = vadd.xlane.f32.xlu0 %v428
  %v430 = vpop.xlane.xlu0 %429
  %v431 = vrsqrt.pop %v409
  %v432 = vmul.f32 %v409, %v431
  %vm433 = vcmp.eq.f32.partialorder %v409, inf
  %v434 = vsel %vm433, %v409, %v432
  %vm435 = vcmp.eq.f32.partialorder %v409, 0.0
  %v436 = vand.u32 %v409, 2147483648
  %v437 = vsel %vm435, %v436, %v434
  %v438 = vrsqrt.pop %v412
  %v439 = vmul.f32 %v412, %v438
  %vm440 = vcmp.eq.f32.partialorder %v412, inf
  %v441 = vsel %vm440, %v412, %v439
  %vm442 = vcmp.eq.f32.partialorder %v412, 0.0
  %v443 = vand.u32 %v412, 2147483648
  %v444 = vsel %vm442, %v443, %v441
  %v445 = vrsqrt.pop %v415
  %v446 = vmul.f32 %v415, %v445
  %vm447 = vcmp.eq.f32.partialorder %v415, inf
  %v448 = vsel %vm447, %v415, %v446
  %vm449 = vcmp.eq.f32.partialorder %v415, 0.0
  %v450 = vand.u32 %v415, 2147483648
  %v451 = vsel %vm449, %v450, %v448
  %v452 = vrsqrt.pop %v418
  %v453 = vmul.f32 %v418, %v452
  %vm454 = vcmp.eq.f32.partialorder %v418, inf
  %v455 = vsel %vm454, %v418, %v453
  %vm456 = vcmp.eq.f32.partialorder %v418, 0.0
  %v457 = vand.u32 %v418, 2147483648
  %v458 = vsel %vm456, %v457, %v455
  %v459 = vrsqrt.pop %v421
  %v460 = vmul.f32 %v421, %v459
  %vm461 = vcmp.eq.f32.partialorder %v421, inf
  %v462 = vsel %vm461, %v421, %v460
  %vm463 = vcmp.eq.f32.partialorder %v421, 0.0
  %v464 = vand.u32 %v421, 2147483648
  %v465 = vsel %vm463, %v464, %v462
  %v466 = vrsqrt.pop %v424
  %v467 = vmul.f32 %v424, %v466
  %vm468 = vcmp.eq.f32.partialorder %v424, inf
  %v469 = vsel %vm468, %v424, %v467
  %vm470 = vcmp.eq.f32.partialorder %v424, 0.0
  %v471 = vand.u32 %v424, 2147483648
  %v472 = vsel %vm470, %v471, %v469
  %v473 = vrsqrt.pop %v427
  %v474 = vmul.f32 %v427, %v473
  %vm475 = vcmp.eq.f32.partialorder %v427, inf
  %v476 = vsel %vm475, %v427, %v474
  %vm477 = vcmp.eq.f32.partialorder %v427, 0.0
  %v478 = vand.u32 %v427, 2147483648
  %v479 = vsel %vm477, %v478, %v476
  %v480 = vrsqrt.pop %v430
  %v481 = vmul.f32 %v430, %v480
  %vm482 = vcmp.eq.f32.partialorder %v430, inf
  %v483 = vsel %vm482, %v430, %v481
  %vm484 = vcmp.eq.f32.partialorder %v430, 0.0
  %v485 = vand.u32 %v430, 2147483648
  %v486 = vsel %vm484, %v485, %v483
  %v487 = vmax.f32 %v437, 1e-12
  %v488 = vmax.f32 %v444, 1e-12
  %v489 = vmax.f32 %v451, 1e-12
  %v490 = vmax.f32 %v458, 1e-12
  %v491 = vmax.f32 %v465, 1e-12
  %v492 = vmax.f32 %v472, 1e-12
  %v493 = vmax.f32 %v479, 1e-12
  %v494 = vmax.f32 %v486, 1e-12
  %v495 = vrcp.pop %v487
  %v496 = vmul.f32 %v126, %v495
  %v497 = vrcp.pop %v488
  %v498 = vmul.f32 %v127, %v497
  %v499 = vrcp.pop %v489
  %v500 = vmul.f32 %v128, %v499
  %v501 = vrcp.pop %v490
  %v502 = vmul.f32 %v129, %v501
  %v503 = vrcp.pop %v491
  %v504 = vmul.f32 %v130, %v503
  %v505 = vrcp.pop %v492
  %v506 = vmul.f32 %v131, %v505
  %v507 = vrcp.pop %v493
  %v508 = vmul.f32 %v132, %v507
  %v509 = vrcp.pop %v494
  %v510 = vmul.f32 %v133, %v509
  %511 = vrot.lane.b32.xlu0 %v134, 104
  %v512 = vpop.permute.xlu0 %511
  %513 = vrot.lane.b32.xlu0 %v135, 104
  %v514 = vpop.permute.xlu0 %513
  %515 = vrot.lane.b32.xlu0 %v136, 104
  %v516 = vpop.permute.xlu0 %515
  %517 = vrot.lane.b32.xlu0 %v137, 104
  %v518 = vpop.permute.xlu0 %517
  %519 = vrot.lane.b32.xlu0 %v138, 104
  %v520 = vpop.permute.xlu0 %519
  %521 = vrot.lane.b32.xlu0 %v139, 104
  %v522 = vpop.permute.xlu0 %521
  %523 = vrot.lane.b32.xlu0 %v140, 104
  %v524 = vpop.permute.xlu0 %523
  %525 = vrot.lane.b32.xlu0 %v141, 104
  %v526 = vpop.permute.xlu0 %525
  %v535 = vsel %vm142, %v512, 0.0
  %536 = vadd.xlane.f32.xlu0 %v535
  %v537 = vpop.xlane.xlu0 %536
  %v538 = vsel %vm142, %v514, 0.0
  %539 = vadd.xlane.f32.xlu0 %v538
  %v540 = vpop.xlane.xlu0 %539
  %v541 = vsel %vm142, %v516, 0.0
  %542 = vadd.xlane.f32.xlu0 %v541
  %v543 = vpop.xlane.xlu0 %542
  %v544 = vsel %vm142, %v518, 0.0
  %545 = vadd.xlane.f32.xlu0 %v544
  %v546 = vpop.xlane.xlu0 %545
  %v547 = vsel %vm142, %v520, 0.0
  %548 = vadd.xlane.f32.xlu0 %v547
  %v549 = vpop.xlane.xlu0 %548
  %v550 = vsel %vm142, %v522, 0.0
  %551 = vadd.xlane.f32.xlu0 %v550
  %v552 = vpop.xlane.xlu0 %551
  %v553 = vsel %vm142, %v524, 0.0
  %554 = vadd.xlane.f32.xlu0 %v553
  %v555 = vpop.xlane.xlu0 %554
  %v556 = vsel %vm142, %v526, 0.0
  %557 = vadd.xlane.f32.xlu0 %v556
  %v558 = vpop.xlane.xlu0 %557
  %v559 = vrsqrt.pop %v537
  %v560 = vmul.f32 %v537, %v559
  %vm561 = vcmp.eq.f32.partialorder %v537, inf
  %v562 = vsel %vm561, %v537, %v560
  %vm563 = vcmp.eq.f32.partialorder %v537, 0.0
  %v564 = vand.u32 %v537, 2147483648
  %v565 = vsel %vm563, %v564, %v562
  %v566 = vrsqrt.pop %v540
  %v567 = vmul.f32 %v540, %v566
  %vm568 = vcmp.eq.f32.partialorder %v540, inf
  %v569 = vsel %vm568, %v540, %v567
  %vm570 = vcmp.eq.f32.partialorder %v540, 0.0
  %v571 = vand.u32 %v540, 2147483648
  %v572 = vsel %vm570, %v571, %v569
  %v573 = vrsqrt.pop %v543
  %v574 = vmul.f32 %v543, %v573
  %vm575 = vcmp.eq.f32.partialorder %v543, inf
  %v576 = vsel %vm575, %v543, %v574
  %vm577 = vcmp.eq.f32.partialorder %v543, 0.0
  %v578 = vand.u32 %v543, 2147483648
  %v579 = vsel %vm577, %v578, %v576
  %v580 = vrsqrt.pop %v546
  %v581 = vmul.f32 %v546, %v580
  %vm582 = vcmp.eq.f32.partialorder %v546, inf
  %v583 = vsel %vm582, %v546, %v581
  %vm584 = vcmp.eq.f32.partialorder %v546, 0.0
  %v585 = vand.u32 %v546, 2147483648
  %v586 = vsel %vm584, %v585, %v583
  %v587 = vrsqrt.pop %v549
  %v588 = vmul.f32 %v549, %v587
  %vm589 = vcmp.eq.f32.partialorder %v549, inf
  %v590 = vsel %vm589, %v549, %v588
  %vm591 = vcmp.eq.f32.partialorder %v549, 0.0
  %v592 = vand.u32 %v549, 2147483648
  %v593 = vsel %vm591, %v592, %v590
  %v594 = vrsqrt.pop %v552
  %v595 = vmul.f32 %v552, %v594
  %vm596 = vcmp.eq.f32.partialorder %v552, inf
  %v597 = vsel %vm596, %v552, %v595
  %vm598 = vcmp.eq.f32.partialorder %v552, 0.0
  %v599 = vand.u32 %v552, 2147483648
  %v600 = vsel %vm598, %v599, %v597
  %v601 = vrsqrt.pop %v555
  %v602 = vmul.f32 %v555, %v601
  %vm603 = vcmp.eq.f32.partialorder %v555, inf
  %v604 = vsel %vm603, %v555, %v602
  %vm605 = vcmp.eq.f32.partialorder %v555, 0.0
  %v606 = vand.u32 %v555, 2147483648
  %v607 = vsel %vm605, %v606, %v604
  %v608 = vrsqrt.pop %v558
  %v609 = vmul.f32 %v558, %v608
  %vm610 = vcmp.eq.f32.partialorder %v558, inf
  %v611 = vsel %vm610, %v558, %v609
  %vm612 = vcmp.eq.f32.partialorder %v558, 0.0
  %v613 = vand.u32 %v558, 2147483648
  %v614 = vsel %vm612, %v613, %v611
  %v615 = vmax.f32 %v565, 1e-12
  %v616 = vmax.f32 %v572, 1e-12
  %v617 = vmax.f32 %v579, 1e-12
  %v618 = vmax.f32 %v586, 1e-12
  %v619 = vmax.f32 %v593, 1e-12
  %v620 = vmax.f32 %v600, 1e-12
  %v621 = vmax.f32 %v607, 1e-12
  %v622 = vmax.f32 %v614, 1e-12
  %v623 = vrcp.pop %v615
  %v624 = vmul.f32 %v126, %v623
  %v625 = vrcp.pop %v616
  %v626 = vmul.f32 %v127, %v625
  %v627 = vrcp.pop %v617
  %v628 = vmul.f32 %v128, %v627
  %v629 = vrcp.pop %v618
  %v630 = vmul.f32 %v129, %v629
  %v631 = vrcp.pop %v619
  %v632 = vmul.f32 %v130, %v631
  %v633 = vrcp.pop %v620
  %v634 = vmul.f32 %v131, %v633
  %v635 = vrcp.pop %v621
  %v636 = vmul.f32 %v132, %v635
  %v637 = vrcp.pop %v622
  %v638 = vmul.f32 %v133, %v637
  %v639 = vsel %vm142, %v232, %v368
  %v640 = vsel %vm142, %v234, %v370
  %v641 = vsel %vm142, %v236, %v372
  %v642 = vsel %vm142, %v238, %v374
  %v643 = vsel %vm142, %v240, %v376
  %v644 = vsel %vm142, %v242, %v378
  %v645 = vsel %vm142, %v244, %v380
  %v646 = vsel %vm142, %v246, %v382
  %vm647 = vcmask 130048
  %v648 = vsel %vm647, %v639, %v496
  %v649 = vsel %vm647, %v640, %v498
  %v650 = vsel %vm647, %v641, %v500
  %v651 = vsel %vm647, %v642, %v502
  %v652 = vsel %vm647, %v643, %v504
  %v653 = vsel %vm647, %v644, %v506
  %v654 = vsel %vm647, %v645, %v508
  %v655 = vsel %vm647, %v646, %v510
  %vm656 = vcmask 195584
  %v657 = vsel %vm656, %v648, %v624
  %v658 = vsel %vm656, %v649, %v626
  %v659 = vsel %vm656, %v650, %v628
  %v660 = vsel %vm656, %v651, %v630
  %v661 = vsel %vm656, %v652, %v632
  %v662 = vsel %vm656, %v653, %v634
  %v663 = vsel %vm656, %v654, %v636
  %v664 = vsel %vm656, %v655, %v638
  %v665 = vpack.c.bf16 %v658, %v657
  %v666 = vpack.c.bf16 %v660, %v659
  %v667 = vpack.c.bf16 %v662, %v661
  %v668 = vpack.c.bf16 %v664, %v663
  %v673 = vunpack.c.l.b16 %v665
  %v674 = vunpack.c.h.b16 %v665
  %v675 = vunpack.c.l.b16 %v666
  %v676 = vunpack.c.h.b16 %v666
  %v677 = vunpack.c.l.b16 %v667
  %v678 = vunpack.c.h.b16 %v667
  %v679 = vunpack.c.l.b16 %v668
  %v680 = vunpack.c.h.b16 %v668
  %v681 = vpack.c.b16 %v673, %v673
  %v682 = vpack.c.b16 %v674, %v674
  %v683 = vpack.c.b16 %v675, %v675
  %v684 = vpack.c.b16 %v676, %v676
  %v685 = vpack.c.b16 %v677, %v677
  %v686 = vpack.c.b16 %v678, %v678
  %v687 = vpack.c.b16 %v679, %v679
  %v688 = vpack.c.b16 %v680, %v680
  %vm697 = vcmask 257024
  %698 = vst.msk [vmem:[%s2] sm:$0xf] %vm697, %v681
  %699 = vst.msk [vmem:[%s2 + $0x4] sm:$0xf] %vm697, %v682
  %700 = vst.msk [vmem:[%s2 + $0x8] sm:$0xf] %vm697, %v683
  %701 = vst.msk [vmem:[%s2 + $0xc] sm:$0xf] %vm697, %v684
  %702 = vst.msk [vmem:[%s2 + $0x10] sm:$0xf] %vm697, %v685
  %703 = vst.msk [vmem:[%s2 + $0x14] sm:$0xf] %vm697, %v686
  %704 = vst.msk [vmem:[%s2 + $0x18] sm:$0xf] %vm697, %v687
  %705 = vst.msk [vmem:[%s2 + $0x1c] sm:$0xf] %vm697, %v688
  // Predicated region
  $region10: #{tpu_custom_call.1} parent=0 // pred_check
    _
  $region11: #{tpu_custom_call.1} parent=0 // pred_check_branch
    %707 = sbr.rel (0) target = $region13
  $region12: #{tpu_custom_call.1} parent=0 // pred_region
    _
  $region13: #{tpu_custom_call.1} parent=0 // pred_fallthru
    _
  // Predicated region
  $region14: #{tpu_custom_call.1} parent=0 // pred_check
    _
  $region15: #{tpu_custom_call.1} parent=0 // pred_check_branch
    %709 = sbr.rel (0) target = $region17
  $region16: #{tpu_custom_call.1} parent=0 // pred_region
    _
  $region17: #{tpu_custom_call.1} parent=0 // pred_fallthru
    _

</llo_original>
